<compile_context>
chip_gen: v5e
topology: v5e:2x2
jax: 0.10.0
libtpu: 0.0.40
codegen_flags: <defaults>
</compile_context>

<pallas_src>
import numpy as np
import jax
import jax.numpy as jnp
from jax.experimental import pallas as pl
from jax.experimental.pallas import tpu as pltpu


# ---------------------------------------------------------------------------
# Host-side constant builders (trace-time, batch independent)
# ---------------------------------------------------------------------------
def _coord_rows(dim):
    """Flattened (2, dim*dim) pixel-coordinate rows matching
    torch.meshgrid(torch.linspace(-1,1,dim), torch.linspace(-1,1,dim)) ('ij')."""
    lin = jnp.linspace(-1.0, 1.0, dim, dtype=jnp.float32)
    g1, g2 = jnp.meshgrid(lin, lin, indexing="ij")
    return jnp.stack([g1.reshape(-1), g2.reshape(-1)], axis=0)          # (2, dim*dim) f32


def _nearest_onehot(h, w, dim):
    """(h*w, dim*dim) one-hot gather matrix for F.interpolate(size=dim, mode='nearest'):
    column p = i*dim + j selects source element (i*h//dim, j*w//dim)."""
    idx_h = (np.arange(dim) * h) // dim
    idx_w = (np.arange(dim) * w) // dim
    src = (idx_h[:, None] * w + idx_w[None, :]).reshape(-1)             # (dim*dim,)
    onehot = np.arange(h * w)[:, None] == src[None, :]                  # (h*w, dim*dim)
    return jnp.asarray(onehot, dtype=jnp.bfloat16)                      # exact 0/1 in bf16


# ---------------------------------------------------------------------------
# Kernels
# ---------------------------------------------------------------------------
def _broadcast_splat_kernel(x_smem, coords_ref, out_ref):
    """2D path. x_smem: (B, C) latent table in SMEM; coords_ref: (2, dim*dim);
    out_ref block: (1, C+2, dim*dim) -> lane-dense slice stores."""
    b = pl.program_id(0)
    n_ch = x_smem.shape[1]
    dd = out_ref.shape[-1]
    # Spatial broadcast of the latent vector: scalar read from SMEM, vector splat.
    for ch in range(n_ch):
        out_ref[0, pl.ds(ch, 1), :] = jnp.full((1, dd), x_smem[b, ch],
                                               dtype=out_ref.dtype)
    # Pixel-coordinate planes (batch independent, precomputed).
    out_ref[0, pl.ds(n_ch, 2), :] = coords_ref[...].astype(out_ref.dtype)


def _resize_concat_kernel(x_ref, g_ref, coords_ref, out_ref):
    """4D path. x_ref: (1, C, H*W); g_ref: (H*W, dim*dim) one-hot gather matrix;
    coords_ref: (2, dim*dim); out_ref block: (1, C+2, dim*dim)."""
    n_ch = x_ref.shape[1]
    x = x_ref[0].astype(jnp.float32)                                    # (C, H*W)
    g = g_ref[...]                                                      # bf16 0/1

    # Exact nearest-neighbor gather on the (otherwise idle) MXU: split x into
    # three bf16-exact components (x1+x2+x3 == x bit-exactly for f32), so each
    # bf16 matmul against the one-hot matrix is exact and their f32 sum
    # reproduces the source values bit-exactly.
    x1 = x.astype(jnp.bfloat16)
    r1 = x - x1.astype(jnp.float32)
    x2 = r1.astype(jnp.bfloat16)
    x3 = (r1 - x2.astype(jnp.float32)).astype(jnp.bfloat16)
    res = (jnp.dot(x1, g, preferred_element_type=jnp.float32)
           + jnp.dot(x2, g, preferred_element_type=jnp.float32)
           + jnp.dot(x3, g, preferred_element_type=jnp.float32))        # (C, dim*dim)

    out_ref[0, pl.ds(0, n_ch), :] = res.astype(out_ref.dtype)
    out_ref[0, pl.ds(n_ch, 2), :] = coords_ref[...].astype(out_ref.dtype)


# ---------------------------------------------------------------------------
# Wrapper
# ---------------------------------------------------------------------------
def broadcast_layer(x, dim):
    """JAX/Pallas equivalent of BroadcastLayer(dim).forward(x) (NCHW layout)."""
    x = jnp.asarray(x)
    b = x.shape[0]
    dd = dim * dim
    coords = _coord_rows(dim)                                           # (2, dd) f32
    itemsize = jnp.dtype(x.dtype).itemsize

    if x.ndim == 2:
        c = x.shape[1]
        out_bytes = b * (c + 2) * dd * itemsize
        out_flat = pl.pallas_call(
            _broadcast_splat_kernel,
            out_shape=jax.ShapeDtypeStruct((b, c + 2, dd), x.dtype),
            grid_spec=pltpu.PrefetchScalarGridSpec(
                num_scalar_prefetch=0,
                grid=(b,),
                in_specs=[
                    # whole latent table in SMEM (tiny): scalar splats in-kernel
                    pl.BlockSpec(memory_space=pltpu.MemorySpace.SMEM),
                    # coord rows: constant block index -> stays VMEM resident
                    pl.BlockSpec((2, dd), lambda i: (0, 0)),
                ],
                out_specs=pl.BlockSpec((1, c + 2, dd), lambda i: (i, 0, 0)),
            ),
            compiler_params=pltpu.CompilerParams(
                dimension_semantics=("parallel",)),
            cost_estimate=pl.CostEstimate(
                flops=0, transcendentals=0,
                bytes_accessed=int(x.size * itemsize + coords.size * 4 + out_bytes)),
        )(x, coords)
        return out_flat.reshape(b, c + 2, dim, dim)

    # 4D path: fuse nearest resize + coord concat in one pass over the input.
    _, c, h, w = x.shape
    hw = h * w
    xf = x.reshape(b, c, hw)                                            # contiguous, free
    g = _nearest_onehot(h, w, dim)                                      # (hw, dd) bf16
    out_bytes = b * (c + 2) * dd * itemsize
    out_flat = pl.pallas_call(
        _resize_concat_kernel,
        out_shape=jax.ShapeDtypeStruct((b, c + 2, dd), x.dtype),
        grid_spec=pltpu.PrefetchScalarGridSpec(
            num_scalar_prefetch=0,
            grid=(b,),
            in_specs=[
                pl.BlockSpec((1, c, hw), lambda i: (i, 0, 0)),
                pl.BlockSpec((hw, dd), lambda i: (0, 0)),               # gather matrix
                pl.BlockSpec((2, dd), lambda i: (0, 0)),                # coord rows
            ],
            out_specs=pl.BlockSpec((1, c + 2, dd), lambda i: (i, 0, 0)),
        ),
        compiler_params=pltpu.CompilerParams(
            dimension_semantics=("parallel",)),
        cost_estimate=pl.CostEstimate(
            flops=int(3 * 2 * b * c * hw * dd), transcendentals=0,
            bytes_accessed=int(xf.size * itemsize + g.size * 2
                               + coords.size * 4 + out_bytes)),
    )(xf, g, coords)
    return out_flat.reshape(b, c + 2, dim, dim)


# ---------------------------------------------------------------------------
# Pure-JAX reference mirroring the PyTorch forward
# ---------------------------------------------------------------------------
def _reference(x, dim):
    x = jnp.asarray(x)
    b = x.shape[0]
    if x.ndim == 2:
        xb = jnp.broadcast_to(x[:, :, None, None], (b, x.shape[1], dim, dim))
    else:
        _, c, h, w = x.shape
        # TODO(synk): PyTorch F.interpolate 'nearest' uses float scale internally;
        # the integer formula below matches it for these size-based resizes.
        ih = (jnp.arange(dim) * h // dim).astype(jnp.int32)
        iw = (jnp.arange(dim) * w // dim).astype(jnp.int32)
        xb = x[:, :, ih][:, :, :, iw]
    lin = jnp.linspace(-1.0, 1.0, dim, dtype=jnp.float32)
    g1, g2 = jnp.meshgrid(lin, lin, indexing="ij")
    g1b = jnp.broadcast_to(g1[None, None].astype(x.dtype), (b, 1, dim, dim))
    g2b = jnp.broadcast_to(g2[None, None].astype(x.dtype), (b, 1, dim, dim))
    return jnp.concatenate([xb, g1b, g2b], axis=1)


if __name__ == "__main__":
    key = jax.random.PRNGKey(0)
    k1, k2 = jax.random.split(key)
    dim = 16

    # 2D path: latent vector (B, C) -> (B, C+2, dim, dim)
    x2d = jax.random.normal(k1, (2, 8), dtype=jnp.float32)
    out2d = jax.block_until_ready(broadcast_layer(x2d, dim))
    ref2d = _reference(x2d, dim)
    assert out2d.shape == (2, 10, dim, dim), out2d.shape
    assert jnp.allclose(out2d, ref2d, atol=1e-6), "2D path mismatch"

    # 4D path: feature map (B, C, H, W) -> fused nearest resize + coords
    x4d = jax.random.normal(k2, (2, 4, 8, 8), dtype=jnp.float32)
    out4d = jax.block_until_ready(broadcast_layer(x4d, dim))
    ref4d = _reference(x4d, dim)
    assert out4d.shape == (2, 6, dim, dim), out4d.shape
    assert jnp.allclose(out4d, ref4d, atol=1e-6), "4D path mismatch"

    print("KERNEL_OK")
</pallas_src>

<mosaic_0001>
module attributes {stable_mosaic.version = 11 : i64} {
  func.func @_broadcast_splat_kernel(%arg0: i32, %arg1: memref<2x8xf32, #tpu.memory_space<smem>>, %arg2: memref<2x256xf32, #tpu.memory_space<vmem>>, %arg3: memref<1x10x256xf32, #tpu.memory_space<vmem>>) attributes {dimension_semantics = [#tpu.dimension_semantics<parallel>], iteration_bounds = array<i64: 2>, scalar_prefetch = 0 : i64, scratch_operands = 0 : i64, tpu.core_type = #tpu.core_type<tc>, window_params = [{transform_indices = @transform_0, window_bounds = array<i64: 2, 8>}, {pipeline_mode = #tpu.pipeline_mode<synchronous>, transform_indices = @transform_1, window_bounds = array<i64: 2, 256>}, {transform_indices = @transform_2, window_bounds = array<i64: 1, 10, 256>}]} {
    %0 = arith.index_cast %arg0 : i32 to index
    %c0 = arith.constant 0 : index
    %1 = memref.load %arg1[%0, %c0] : memref<2x8xf32, #tpu.memory_space<smem>>
    %2 = vector.broadcast %1 : f32 to vector<1x256xf32>
    %c0_0 = arith.constant 0 : index
    %c0_1 = arith.constant 0 : index
    %c0_2 = arith.constant 0 : index
    %3 = vector.load %arg3[%c0_0, %c0_1, %c0_2] : memref<1x10x256xf32, #tpu.memory_space<vmem>>, vector<1x1x256xf32>
    %4 = vector.shape_cast %3 : vector<1x1x256xf32> to vector<1x256xf32>
    %5 = vector.shape_cast %2 : vector<1x256xf32> to vector<1x1x256xf32>
    tpu.vector_store %arg3[%c0_0, %c0_1, %c0_2], %5 {strides = array<i32>} : memref<1x10x256xf32, #tpu.memory_space<vmem>>, vector<1x1x256xf32>,
    %6 = arith.index_cast %arg0 : i32 to index
    %c1 = arith.constant 1 : index
    %7 = memref.load %arg1[%6, %c1] : memref<2x8xf32, #tpu.memory_space<smem>>
    %8 = vector.broadcast %7 : f32 to vector<1x256xf32>
    %c0_3 = arith.constant 0 : index
    %c1_4 = arith.constant 1 : index
    %c0_5 = arith.constant 0 : index
    %9 = vector.load %arg3[%c0_3, %c1_4, %c0_5] : memref<1x10x256xf32, #tpu.memory_space<vmem>>, vector<1x1x256xf32>
    %10 = vector.shape_cast %9 : vector<1x1x256xf32> to vector<1x256xf32>
    %11 = vector.shape_cast %8 : vector<1x256xf32> to vector<1x1x256xf32>
    tpu.vector_store %arg3[%c0_3, %c1_4, %c0_5], %11 {strides = array<i32>} : memref<1x10x256xf32, #tpu.memory_space<vmem>>, vector<1x1x256xf32>,
    %12 = arith.index_cast %arg0 : i32 to index
    %c2 = arith.constant 2 : index
    %13 = memref.load %arg1[%12, %c2] : memref<2x8xf32, #tpu.memory_space<smem>>
    %14 = vector.broadcast %13 : f32 to vector<1x256xf32>
    %c0_6 = arith.constant 0 : index
    %c2_7 = arith.constant 2 : index
    %c0_8 = arith.constant 0 : index
    %15 = vector.load %arg3[%c0_6, %c2_7, %c0_8] : memref<1x10x256xf32, #tpu.memory_space<vmem>>, vector<1x1x256xf32>
    %16 = vector.shape_cast %15 : vector<1x1x256xf32> to vector<1x256xf32>
    %17 = vector.shape_cast %14 : vector<1x256xf32> to vector<1x1x256xf32>
    tpu.vector_store %arg3[%c0_6, %c2_7, %c0_8], %17 {strides = array<i32>} : memref<1x10x256xf32, #tpu.memory_space<vmem>>, vector<1x1x256xf32>,
    %18 = arith.index_cast %arg0 : i32 to index
    %c3 = arith.constant 3 : index
    %19 = memref.load %arg1[%18, %c3] : memref<2x8xf32, #tpu.memory_space<smem>>
    %20 = vector.broadcast %19 : f32 to vector<1x256xf32>
    %c0_9 = arith.constant 0 : index
    %c3_10 = arith.constant 3 : index
    %c0_11 = arith.constant 0 : index
    %21 = vector.load %arg3[%c0_9, %c3_10, %c0_11] : memref<1x10x256xf32, #tpu.memory_space<vmem>>, vector<1x1x256xf32>
    %22 = vector.shape_cast %21 : vector<1x1x256xf32> to vector<1x256xf32>
    %23 = vector.shape_cast %20 : vector<1x256xf32> to vector<1x1x256xf32>
    tpu.vector_store %arg3[%c0_9, %c3_10, %c0_11], %23 {strides = array<i32>} : memref<1x10x256xf32, #tpu.memory_space<vmem>>, vector<1x1x256xf32>,
    %24 = arith.index_cast %arg0 : i32 to index
    %c4 = arith.constant 4 : index
    %25 = memref.load %arg1[%24, %c4] : memref<2x8xf32, #tpu.memory_space<smem>>
    %26 = vector.broadcast %25 : f32 to vector<1x256xf32>
    %c0_12 = arith.constant 0 : index
    %c4_13 = arith.constant 4 : index
    %c0_14 = arith.constant 0 : index
    %27 = vector.load %arg3[%c0_12, %c4_13, %c0_14] : memref<1x10x256xf32, #tpu.memory_space<vmem>>, vector<1x1x256xf32>
    %28 = vector.shape_cast %27 : vector<1x1x256xf32> to vector<1x256xf32>
    %29 = vector.shape_cast %26 : vector<1x256xf32> to vector<1x1x256xf32>
    tpu.vector_store %arg3[%c0_12, %c4_13, %c0_14], %29 {strides = array<i32>} : memref<1x10x256xf32, #tpu.memory_space<vmem>>, vector<1x1x256xf32>,
    %30 = arith.index_cast %arg0 : i32 to index
    %c5 = arith.constant 5 : index
    %31 = memref.load %arg1[%30, %c5] : memref<2x8xf32, #tpu.memory_space<smem>>
    %32 = vector.broadcast %31 : f32 to vector<1x256xf32>
    %c0_15 = arith.constant 0 : index
    %c5_16 = arith.constant 5 : index
    %c0_17 = arith.constant 0 : index
    %33 = vector.load %arg3[%c0_15, %c5_16, %c0_17] : memref<1x10x256xf32, #tpu.memory_space<vmem>>, vector<1x1x256xf32>
    %34 = vector.shape_cast %33 : vector<1x1x256xf32> to vector<1x256xf32>
    %35 = vector.shape_cast %32 : vector<1x256xf32> to vector<1x1x256xf32>
    tpu.vector_store %arg3[%c0_15, %c5_16, %c0_17], %35 {strides = array<i32>} : memref<1x10x256xf32, #tpu.memory_space<vmem>>, vector<1x1x256xf32>,
    %36 = arith.index_cast %arg0 : i32 to index
    %c6 = arith.constant 6 : index
    %37 = memref.load %arg1[%36, %c6] : memref<2x8xf32, #tpu.memory_space<smem>>
    %38 = vector.broadcast %37 : f32 to vector<1x256xf32>
    %c0_18 = arith.constant 0 : index
    %c6_19 = arith.constant 6 : index
    %c0_20 = arith.constant 0 : index
    %39 = vector.load %arg3[%c0_18, %c6_19, %c0_20] : memref<1x10x256xf32, #tpu.memory_space<vmem>>, vector<1x1x256xf32>
    %40 = vector.shape_cast %39 : vector<1x1x256xf32> to vector<1x256xf32>
    %41 = vector.shape_cast %38 : vector<1x256xf32> to vector<1x1x256xf32>
    tpu.vector_store %arg3[%c0_18, %c6_19, %c0_20], %41 {strides = array<i32>} : memref<1x10x256xf32, #tpu.memory_space<vmem>>, vector<1x1x256xf32>,
    %42 = arith.index_cast %arg0 : i32 to index
    %c7 = arith.constant 7 : index
    %43 = memref.load %arg1[%42, %c7] : memref<2x8xf32, #tpu.memory_space<smem>>
    %44 = vector.broadcast %43 : f32 to vector<1x256xf32>
    %c0_21 = arith.constant 0 : index
    %c7_22 = arith.constant 7 : index
    %c0_23 = arith.constant 0 : index
    %45 = vector.load %arg3[%c0_21, %c7_22, %c0_23] : memref<1x10x256xf32, #tpu.memory_space<vmem>>, vector<1x1x256xf32>
    %46 = vector.shape_cast %45 : vector<1x1x256xf32> to vector<1x256xf32>
    %47 = vector.shape_cast %44 : vector<1x256xf32> to vector<1x1x256xf32>
    tpu.vector_store %arg3[%c0_21, %c7_22, %c0_23], %47 {strides = array<i32>} : memref<1x10x256xf32, #tpu.memory_space<vmem>>, vector<1x1x256xf32>,
    %c0_24 = arith.constant 0 : index
    %c0_25 = arith.constant 0 : index
    %48 = vector.load %arg2[%c0_24, %c0_25] : memref<2x256xf32, #tpu.memory_space<vmem>>, vector<2x256xf32>
    %c0_26 = arith.constant 0 : index
    %c8 = arith.constant 8 : index
    %c0_27 = arith.constant 0 : index
    %49 = vector.load %arg3[%c0_26, %c8, %c0_27] : memref<1x10x256xf32, #tpu.memory_space<vmem>>, vector<1x2x256xf32>
    %50 = vector.shape_cast %49 : vector<1x2x256xf32> to vector<2x256xf32>
    %51 = vector.shape_cast %48 : vector<2x256xf32> to vector<1x2x256xf32>
    tpu.vector_store %arg3[%c0_26, %c8, %c0_27], %51 {strides = array<i32>} : memref<1x10x256xf32, #tpu.memory_space<vmem>>, vector<1x2x256xf32>,
    return
  }
  func.func @transform_0(%arg0: i32) -> (i32, i32) {
    %c0_i32 = arith.constant 0 : i32
    %c0_i32_0 = arith.constant 0 : i32
    %c0_i32_1 = arith.constant 0 : i32
    return %c0_i32, %c0_i32_0 : i32, i32
  }
  func.func @transform_1(%arg0: i32) -> (i32, i32) {
    %c0_i32 = arith.constant 0 : i32
    %c0_i32_0 = arith.constant 0 : i32
    %c0_i32_1 = arith.constant 0 : i32
    return %c0_i32, %c0_i32_0 : i32, i32
  }
  func.func @transform_2(%arg0: i32) -> (i32, i32, i32) {
    %c0_i32 = arith.constant 0 : i32
    %c0_i32_0 = arith.constant 0 : i32
    %c0_i32_1 = arith.constant 0 : i32
    return %arg0, %c0_i32, %c0_i32_0 : i32, i32, i32
  }
}

</mosaic_0001>

<llo_original>
// kernel: tpu_custom_call.1
$region0: #{tpu_custom_call.1}
  #allocation0 [shape = 'u32[]', space=smem, size = 0x4, offset = 0x4, fixed_abs, tag = 'smem constant byte address 0x4 - core index']
  #allocation1 [shape = 'u32[72,128]{1,0:T(1,128)}', space=vmem, size = 0x9000, scoped, tag = 'internal scratch']
  %s0 = inlined_call_operand.hbm [shape: f32[2,8], index: 0, kind: input, shape index: {}]
  %s1 = inlined_call_operand.hbm [shape: f32[2,256], index: 1, kind: input, shape index: {}]
  %s2 = inlined_call_operand.vmem [shape: f32[2,10,256], index: 2, kind: output, shape index: {}]
  %s3 = sld [smem:[#allocation0]]
  $region49: #{tpu_custom_call.1} parent=0
    _
  %s5 = ssub.s32 1, %s3
  %s6 = scalar_select 0, %s5, %s3
  $region1: #{tpu_custom_call.1} parent=0
    #allocation2 [shape = 'u8[1024]{0}', space=smem, size = 0x400, scoped, tag = 'input window, operand 0, single buffered']
    #allocation3 [shape = 's32[2]{0}', space=sflag, size = 0x8, scoped, tag = 'scoped memory for tpu_custom_call.1']
    #allocation4 [shape = 's32[2]{0}', space=sflag, size = 0x8, scoped, tag = 'scoped memory for tpu_custom_call.1']
    #allocation5 [shape = 'u8[2048]{0}', space=vmem, size = 0x800, scoped, tag = 'input window, operand 1, single buffered']
    %7 = vsyncpa [#allocation4], 0
    %8 = vsyncpa [#allocation3], 0
    loop: start=0, step=1, limit=4
    $region2: #{tpu_custom_call.1} parent=1 // loop_pre_header
      _
    $region3: #{tpu_custom_call.1} parent=1 // loop_header
      %s10 = sphi 0, %s14
      %p11 = scmp.ge.s32.totalorder %s10, 4
      %s18 = sphi 0, %s18
      %s20 = sphi 0, %s18
      %s21 = sphi 0, %s20
      %s35 = sphi 0, %s21
      %s39 = sphi 0, %s39
      %s41 = sphi 0, %s39
      %s42 = sphi 0, %s41
      %s56 = sphi 0, %s42
      %s62 = sphi 0, %s64
      %s65 = sphi 0, %s62
      %s66 = sphi 0, %s65
      %s82 = sphi 0, %s66
    $region4: #{tpu_custom_call.1} parent=1 // loop_header_branch
      %13 = sbr.rel (%p11) target = $region8
    $region5: #{tpu_custom_call.1} parent=1 // loop_body
      %s15 = ssub.s32 %s10, 1
      %s16 = ssub.s32 %s10, 2
      %s17 = sadd.s32 %s10, 1
      %s19 = sadd.s32 %s18, 1
      %p22 = scmp.eq.s32.totalorder %s10, 1
      %p23 = scmp.ne.s32.totalorder %s18, %s20
      %p24 = scmp.eq.s32.totalorder %s10, 0
      %p25 = por %p23, %p24
      %p26 = scmp.ne.s32.totalorder %s18, %s20
      %p27 = scmp.eq.s32.totalorder %s15, 1
      %p28 = por %p26, %p27
      %p29 = scmp.ne.s32.totalorder %s20, %s21
      %p30 = scmp.eq.s32.totalorder %s15, 0
      %p31 = por %p29, %p30
      %p32 = scmp.ne.s32.totalorder %s20, %s21
      %p33 = scmp.eq.s32.totalorder %s16, 1
      %p34 = por %p32, %p33
      %p36 = scmp.ne.s32.totalorder %s21, %s35
      %p37 = scmp.eq.s32.totalorder %s16, 0
      %p38 = por %p36, %p37
      %s40 = sadd.s32 %s39, 1
      %p43 = scmp.eq.s32.totalorder %s10, 1
      %p44 = scmp.ne.s32.totalorder %s39, %s41
      %p45 = scmp.eq.s32.totalorder %s10, 0
      %p46 = por %p44, %p45
      %p47 = scmp.ne.s32.totalorder %s39, %s41
      %p48 = scmp.eq.s32.totalorder %s15, 1
      %p49 = por %p47, %p48
      %p50 = scmp.ne.s32.totalorder %s41, %s42
      %p51 = scmp.eq.s32.totalorder %s15, 0
      %p52 = por %p50, %p51
      %p53 = scmp.ne.s32.totalorder %s41, %s42
      %p54 = scmp.eq.s32.totalorder %s16, 1
      %p55 = por %p53, %p54
      %p57 = scmp.ne.s32.totalorder %s42, %s56
      %p58 = scmp.eq.s32.totalorder %s16, 0
      %p59 = por %p57, %p58
      %s60 = ssub.s32 %s10, %s17
      %p61 = scmp.eq.s32.totalorder %s60, 0
      %s63 = sadd.s32 %s62, 1
      %s64 = scalar_select %p61, %s62, %s63
      %p67 = pneg %p61
      %p68 = scmp.eq.s32.totalorder %s10, 1
      %p69 = por %p67, %p68
      %p70 = scmp.ne.s32.totalorder %s62, %s65
      %p71 = scmp.eq.s32.totalorder %s10, 0
      %p72 = por %p70, %p71
      %p73 = scmp.ne.s32.totalorder %s62, %s65
      %p74 = scmp.eq.s32.totalorder %s15, 1
      %p75 = por %p73, %p74
      %p76 = scmp.ne.s32.totalorder %s65, %s66
      %p77 = scmp.eq.s32.totalorder %s15, 0
      %p78 = por %p76, %p77
      %p79 = scmp.ne.s32.totalorder %s65, %s66
      %p80 = scmp.eq.s32.totalorder %s16, 1
      %p81 = por %p79, %p80
      %p83 = scmp.ne.s32.totalorder %s66, %s82
      %p84 = scmp.eq.s32.totalorder %s16, 0
      %p85 = por %p83, %p84
      %p86 = scmp.le.s32.totalorder 1, %s10
      %p87 = scmp.lt.s32.totalorder %s10, 3
      %p88 = pnand %p86, %p87
      %p89 = pneg %p88
      // Predicated region
      $region9: #{tpu_custom_call.1} parent=5 // pred_check
        _
      $region10: #{tpu_custom_call.1} parent=5 // pred_check_branch
        %91 = sbr.rel (%p88) target = $region12
      $region11: #{tpu_custom_call.1} parent=5 // pred_region
        %s92 = ssub.s32 %s10, 1
        // Predicated region
        $region13: #{tpu_custom_call.1} parent=11 // pred_check
          %p93 = pneg %p31
        $region14: #{tpu_custom_call.1} parent=11 // pred_check_branch
          %95 = sbr.rel (%p93) target = $region16
        $region15: #{tpu_custom_call.1} parent=11 // pred_region
          %97 = vsyncadd [#allocation4], 0
          %s99 = sshll.u32 %s0, 4
          %s100 = int_to_ptr.hbm [resolvable:$true] %s99
          %102 = dma.hbm_to_smem %s100, 32, [#allocation2], [#allocation4]
        $region16: #{tpu_custom_call.1} parent=11 // pred_fallthru
          _
        // Predicated region
        $region17: #{tpu_custom_call.1} parent=11 // pred_check
          %p103 = pneg %p52
        $region18: #{tpu_custom_call.1} parent=11 // pred_check_branch
          %105 = sbr.rel (%p103) target = $region20
        $region19: #{tpu_custom_call.1} parent=11 // pred_region
          %107 = vsyncadd [#allocation3], 0
          %s109 = sshll.u32 %s1, 4
          %s110 = int_to_ptr.hbm [resolvable:$true] %s109
          %s111 = sshll.u32 [#allocation5], 4
          %s112 = int_to_ptr.vmem [resolvable:$true] %s111
          %114 = dma.hbm_to_vmem [thread:$0]  %s110, 64, %s112, [#allocation3]
        $region20: #{tpu_custom_call.1} parent=11 // pred_fallthru
          _
      $region12: #{tpu_custom_call.1} parent=5 // pred_fallthru
        _
      %p115 = scmp.lt.s32.totalorder %s10, 2
      // Predicated region
      $region21: #{tpu_custom_call.1} parent=5 // pred_check
        %p116 = pneg %p115
      $region22: #{tpu_custom_call.1} parent=5 // pred_check_branch
        %118 = sbr.rel (%p116) target = $region24
      $region23: #{tpu_custom_call.1} parent=5 // pred_region
        _
      $region24: #{tpu_custom_call.1} parent=5 // pred_fallthru
        _
      %p119 = scmp.le.s32.totalorder 1, %s10
      %p120 = scmp.lt.s32.totalorder %s10, 3
      %p121 = pnand %p119, %p120
      %p122 = pneg %p121
      // Predicated region
      $region25: #{tpu_custom_call.1} parent=5 // pred_check
        _
      $region26: #{tpu_custom_call.1} parent=5 // pred_check_branch
        %124 = sbr.rel (%p121) target = $region28
      $region27: #{tpu_custom_call.1} parent=5 // pred_region
        %s125 = ssub.s32 %s10, 1
        // Predicated region
        $region29: #{tpu_custom_call.1} parent=27 // pred_check
          %p126 = pneg %p31
        $region30: #{tpu_custom_call.1} parent=27 // pred_check_branch
          %128 = sbr.rel (%p126) target = $region32
        $region31: #{tpu_custom_call.1} parent=27 // pred_region
          %130 = dma.done [#allocation4], 32
        $region32: #{tpu_custom_call.1} parent=27 // pred_fallthru
          _
        // Predicated region
        $region33: #{tpu_custom_call.1} parent=27 // pred_check
          %p131 = pneg %p52
        $region34: #{tpu_custom_call.1} parent=27 // pred_check_branch
          %133 = sbr.rel (%p131) target = $region36
        $region35: #{tpu_custom_call.1} parent=27 // pred_region
          %135 = dma.done [#allocation3], 64
        $region36: #{tpu_custom_call.1} parent=27 // pred_fallthru
          _
        %136 = sfence
        %p137 = pneg %p31
        %p138 = pneg %p28
        %p139 = pneg %p52
        %p140 = pneg %p49
        %p141 = pneg %p78
        %p142 = pneg %p75
        %p143 = scmp.lt.s32.totalorder %s15, 1
        %s144 = scalar_select %p143, %s15, 1
        %s145 = smul.addr %s144, 4
        %s146 = smul.addr %s145, 8
        %s147 = scalar_lea.vmem %s2, %s146
        %p148 = scmp.lt.s32.totalorder %s15, 1
        %s149 = scalar_select %p148, %s15, 1
        %s150 = smul.addr %s149, 4
        %s151 = smul.addr %s150, 8
        %s152 = scalar_lea.vmem %s2, %s151
        %s153 = smul.u32 %s15, 128
        %s154 = sld [smem:[#allocation2 + %s153]]
        %v155 = vstv %s154
        %v156 = vlaneseq
        %vm157 = vcmp.ge.s32.totalorder %v156, 0
        %vm158 = vcmp.lt.s32.totalorder %v156, 256
        %vm159 = vmand %vm157, %vm158
        %160 = vst.msk [vmem:[%s152] ss:$8 sm:$0x3] %vm159, %v155
        %161 = vst.msk [vmem:[%s152] ss:$8 sm:$0x0] %vm159, %v155
        %s162 = sadd.s32 %s153, 1
        %s163 = sld [smem:[#allocation2 + %s162]]
        %v164 = vstv %s163
        %s165 = scalar_lea.vmem %s152, 1
        %166 = vst.msk [vmem:[%s165] ss:$8 sm:$0x3] %vm159, %v164
        %167 = vst.msk [vmem:[%s165] ss:$8 sm:$0x0] %vm159, %v164
        %s168 = sadd.s32 %s153, 2
        %s169 = sld [smem:[#allocation2 + %s168]]
        %v170 = vstv %s169
        %s171 = scalar_lea.vmem %s152, 2
        %172 = vst.msk [vmem:[%s171] ss:$8 sm:$0x3] %vm159, %v170
        %173 = vst.msk [vmem:[%s171] ss:$8 sm:$0x0] %vm159, %v170
        %s174 = sadd.s32 %s153, 3
        %s175 = sld [smem:[#allocation2 + %s174]]
        %v176 = vstv %s175
        %s177 = scalar_lea.vmem %s152, 3
        %178 = vst.msk [vmem:[%s177] ss:$8 sm:$0x3] %vm159, %v176
        %179 = vst.msk [vmem:[%s177] ss:$8 sm:$0x0] %vm159, %v176
        %s180 = sadd.s32 %s153, 4
        %s181 = sld [smem:[#allocation2 + %s180]]
        %v182 = vstv %s181
        %s183 = scalar_lea.vmem %s152, 4
        %184 = vst.msk [vmem:[%s183] ss:$8 sm:$0x3] %vm159, %v182
        %185 = vst.msk [vmem:[%s183] ss:$8 sm:$0x0] %vm159, %v182
        %s186 = sadd.s32 %s153, 5
        %s187 = sld [smem:[#allocation2 + %s186]]
        %v188 = vstv %s187
        %s189 = scalar_lea.vmem %s152, 5
        %190 = vst.msk [vmem:[%s189] ss:$8 sm:$0x3] %vm159, %v188
        %191 = vst.msk [vmem:[%s189] ss:$8 sm:$0x0] %vm159, %v188
        %s192 = sadd.s32 %s153, 6
        %s193 = sld [smem:[#allocation2 + %s192]]
        %v194 = vstv %s193
        %s195 = scalar_lea.vmem %s152, 6
        %196 = vst.msk [vmem:[%s195] ss:$8 sm:$0x3] %vm159, %v194
        %197 = vst.msk [vmem:[%s195] ss:$8 sm:$0x0] %vm159, %v194
        %s198 = sadd.s32 %s153, 7
        %s199 = sld [smem:[#allocation2 + %s198]]
        %v200 = vstv %s199
        %s201 = scalar_lea.vmem %s152, 7
        %202 = vst.msk [vmem:[%s201] ss:$8 sm:$0x3] %vm159, %v200
        %203 = vst.msk [vmem:[%s201] ss:$8 sm:$0x0] %vm159, %v200
        %v204 = vld [vmem:[#allocation5] sm:$0xf]
        %206 = vst [vmem:[#allocation1] ss:$4 sm:$0xff] %v204
        %v207 = vld.sshfl [vmem:[#allocation1] sm:$0xff pattern:$0x73625140]
        %v208 = vld.sshfl [vmem:[#allocation1 + $0x8] sm:$0xff pattern:$0x73625140]
        %211 = vst [vmem:[%s152 + $0x10] sm:$0x3] %v207
        %212 = vst [vmem:[%s152 + $0x18] sm:$0x3] %v208
        %p213 = scmp.lt.s32.totalorder %s15, 1
        %s214 = scalar_select %p213, %s15, 1
        %s215 = smul.addr %s214, 4
        %s216 = smul.addr %s215, 8
        %s217 = scalar_lea.vmem %s2, %s216
        // Predicated region
        $region37: #{tpu_custom_call.1} parent=27 // pred_check
          %p218 = pneg %p75
        $region38: #{tpu_custom_call.1} parent=27 // pred_check_branch
          %220 = sbr.rel (%p218) target = $region40
        $region39: #{tpu_custom_call.1} parent=27 // pred_region
          _
        $region40: #{tpu_custom_call.1} parent=27 // pred_fallthru
          _
      $region28: #{tpu_custom_call.1} parent=5 // pred_fallthru
        _
      %p221 = scmp.le.s32.totalorder 2, %s10
      // Predicated region
      $region41: #{tpu_custom_call.1} parent=5 // pred_check
        %p222 = pneg %p221
      $region42: #{tpu_custom_call.1} parent=5 // pred_check_branch
        %224 = sbr.rel (%p222) target = $region44
      $region43: #{tpu_custom_call.1} parent=5 // pred_region
        %s225 = ssub.s32 %s10, 2
        // Predicated region
        $region45: #{tpu_custom_call.1} parent=43 // pred_check
          %p226 = pneg %p81
        $region46: #{tpu_custom_call.1} parent=43 // pred_check_branch
          %228 = sbr.rel (%p226) target = $region48
        $region47: #{tpu_custom_call.1} parent=43 // pred_region
          %p229 = scmp.lt.s32.totalorder %s16, 1
          %s230 = scalar_select %p229, %s16, 1
          %s231 = smul.addr %s230, 4
          %s232 = smul.addr %s231, 8
          %s233 = scalar_lea.vmem %s2, %s232
        $region48: #{tpu_custom_call.1} parent=43 // pred_fallthru
          _
      $region44: #{tpu_custom_call.1} parent=5 // pred_fallthru
        _
    $region6: #{tpu_custom_call.1} parent=1 // loop_footer
      %s14 = sadd.s32 1, %s10
    $region7: #{tpu_custom_call.1} parent=1 // loop_footer_branch
      %9 = sbr.rel target = $region3
    $region8: #{tpu_custom_call.1} parent=1 // loop_exit
      _
    %234 = vsyncpa [#allocation3], 1
    %s235 = scalar_lea.sflag [#allocation3], 1
    %236 = vsyncpa %s235, 1
    %237 = vsyncpa [#allocation4], 1
    %s238 = scalar_lea.sflag [#allocation4], 1
    %239 = vsyncpa %s238, 1

</llo_original>
